<compile_context>
chip_gen: v5e
topology: v5e:2x2
jax: 0.10.0
libtpu: 0.0.40
codegen_flags: <defaults>
</compile_context>

<pallas_src>
import math
import jax
import jax.numpy as jnp
from jax.experimental import pallas as pl
from jax.experimental.pallas import tpu as pltpu


_LANE = 128
_MAX_TILE = 32768          # cap on lanes per spatial tile
_VMEM_BUDGET = 8 << 20     # ~8 MiB of double-buffered in+out blocks (safe on v5e/v6e/v7x)


def _round_up(n, m):
    return ((n + m - 1) // m) * m


def _pick_spatial_tile(hw_p, bytes_per_lane, batch):
    """Largest lane-dense tile (multiple of 128) that divides hw_p, respects the VMEM
    budget, and keeps >=2 grid steps when batch == 1 (v7x megacore utilization)."""
    max_tl = (_VMEM_BUDGET // (2 * bytes_per_lane)) // _LANE * _LANE
    max_tl = max(_LANE, min(max_tl, _MAX_TILE, hw_p))
    if batch == 1 and hw_p >= 2 * _LANE:
        # never let the tile collapse to the whole extent -> at least 2 parallel tiles
        max_tl = max(_LANE, min(max_tl, (hw_p // 2) // _LANE * _LANE))
    t = max_tl
    while t > _LANE:
        if hw_p % t == 0:
            return t
        t -= _LANE
    return _LANE


# ------------------------------------------------------------------ 1x1 conv --
def _conv1x1_kernel(x_ref, w_ref, b_ref, o_ref):
    # x_ref: [c_in, TL]   w_ref: [c_out, c_in]   b_ref: [c_out, 1] (f32)   o_ref: [c_out, TL]
    y = jnp.dot(w_ref[...], x_ref[...], preferred_element_type=jnp.float32)
    o_ref[...] = (y + b_ref[...]).astype(o_ref.dtype)


def conv1x1_pallas(x, weight, bias):
    """x: [B, c_in, H, W]; weight: [c_out, c_in, 1, 1] (PyTorch layout); bias: [c_out]."""
    b, c_in, h, w = x.shape
    c_out = weight.shape[0]
    hw = h * w
    hw_p = _round_up(hw, _LANE)
    itemsize = jnp.dtype(x.dtype).itemsize
    tl = _pick_spatial_tile(hw_p, (c_in + c_out) * itemsize, b)

    x2 = x.reshape(b, c_in, hw)
    if hw_p != hw:
        x2 = jnp.pad(x2, ((0, 0), (0, 0), (0, hw_p - hw)))
    w2 = weight.reshape(c_out, c_in).astype(x.dtype)      # tiny, resident in VMEM
    b2 = bias.reshape(c_out, 1).astype(jnp.float32)       # added in the f32 accumulator

    cost = pl.CostEstimate(
        flops=2 * b * c_in * c_out * hw_p,
        transcendentals=0,
        bytes_accessed=(b * (c_in + c_out) * hw_p + c_out * (c_in + 1)) * itemsize,
    )

    out = pl.pallas_call(
        _conv1x1_kernel,
        out_shape=jax.ShapeDtypeStruct((b, c_out, hw_p), x.dtype),
        grid=(b, hw_p // tl),
        in_specs=[
            pl.BlockSpec((None, c_in, tl), lambda i, j: (i, 0, j)),   # x tile (batch squeezed)
            pl.BlockSpec((c_out, c_in), lambda i, j: (0, 0)),         # weight (resident)
            pl.BlockSpec((c_out, 1), lambda i, j: (0, 0)),            # bias   (resident)
        ],
        out_specs=pl.BlockSpec((None, c_out, tl), lambda i, j: (i, 0, j)),
        compiler_params=pltpu.CompilerParams(
            dimension_semantics=("parallel", "parallel")),
        cost_estimate=cost,
    )(x2, w2, b2)

    if hw_p != hw:
        out = out[:, :, :hw]
    return out.reshape(b, c_out, h, w)


# -------------------------------------------------------- channel zero-pad ----
def _make_pad_kernel(pad_len, c_in):
    def kernel(x_ref, o_ref):
        # Two streaming slice-stores (no concatenate): zeros in front (F.pad semantics),
        # then the input channels.
        o_ref[pl.ds(0, pad_len), :] = jnp.zeros((pad_len, o_ref.shape[-1]), o_ref.dtype)
        o_ref[pl.ds(pad_len, c_in), :] = x_ref[...]
    return kernel


def pad_channels_pallas(x, pad_len):
    b, c_in, h, w = x.shape
    c_out = c_in + pad_len
    hw = h * w
    hw_p = _round_up(hw, _LANE)
    itemsize = jnp.dtype(x.dtype).itemsize
    tl = _pick_spatial_tile(hw_p, (c_in + c_out) * itemsize, b)

    x2 = x.reshape(b, c_in, hw)
    if hw_p != hw:
        x2 = jnp.pad(x2, ((0, 0), (0, 0), (0, hw_p - hw)))

    cost = pl.CostEstimate(
        flops=0,
        transcendentals=0,
        bytes_accessed=b * (c_in + c_out) * hw_p * itemsize,
    )

    out = pl.pallas_call(
        _make_pad_kernel(pad_len, c_in),
        out_shape=jax.ShapeDtypeStruct((b, c_out, hw_p), x.dtype),
        grid=(b, hw_p // tl),
        in_specs=[pl.BlockSpec((None, c_in, tl), lambda i, j: (i, 0, j))],
        out_specs=pl.BlockSpec((None, c_out, tl), lambda i, j: (i, 0, j)),
        compiler_params=pltpu.CompilerParams(
            dimension_semantics=("parallel", "parallel")),
        cost_estimate=cost,
    )(x2)

    if hw_p != hw:
        out = out[:, :, :hw]
    return out.reshape(b, c_out, h, w)


# ---------------------------------------------------------------- Align.forward
def align_forward(x, c_in, c_out, conv_weight=None, conv_bias=None):
    """Align.forward: 1x1 conv if c_in > c_out, front zero-pad if c_in < c_out, else identity."""
    assert x.shape[1] == c_in
    if c_in > c_out:
        return conv1x1_pallas(x, conv_weight, conv_bias)
    if c_in < c_out:
        return pad_channels_pallas(x, c_out - c_in)
    return x


if __name__ == "__main__":
    key = jax.random.PRNGKey(0)
    kx1, kx2, kw, kb = jax.random.split(key, 4)

    # --- Branch 1: c_in > c_out -> 1x1 conv (the only compute path), f32 ---
    B, C_IN, C_OUT, H, W = 2, 8, 4, 16, 16
    x = jax.random.normal(kx1, (B, C_IN, H, W), jnp.float32)
    # nn.Conv2d default init: U(-1/sqrt(fan_in), 1/sqrt(fan_in)), fan_in = c_in*1*1
    bound = 1.0 / math.sqrt(C_IN)
    weight = jax.random.uniform(kw, (C_OUT, C_IN, 1, 1), jnp.float32, -bound, bound)
    bias = jax.random.uniform(kb, (C_OUT,), jnp.float32, -bound, bound)

    out = align_forward(x, C_IN, C_OUT, weight, bias)
    jax.block_until_ready(out)
    ref = jnp.einsum("oc,bchw->bohw", weight.reshape(C_OUT, C_IN), x) \
        + bias[None, :, None, None]
    assert out.shape == (B, C_OUT, H, W)
    assert out.dtype == x.dtype
    assert jnp.allclose(out, ref, atol=1e-5, rtol=1e-5)

    # --- Branch 1b: conv path preserves bf16 (no wrapper float32 cast) ---
    xb = x.astype(jnp.bfloat16)
    outb = align_forward(xb, C_IN, C_OUT, weight.astype(jnp.bfloat16),
                         bias.astype(jnp.bfloat16))
    jax.block_until_ready(outb)
    assert outb.dtype == jnp.bfloat16
    assert jnp.allclose(outb.astype(jnp.float32), ref, atol=3e-2, rtol=3e-2)

    # --- Branch 2: c_in < c_out -> zero-pad channels at the front ---
    C_IN2, C_OUT2 = 4, 8
    x2 = jax.random.normal(kx2, (B, C_IN2, H, W), jnp.float32)
    out2 = align_forward(x2, C_IN2, C_OUT2)
    jax.block_until_ready(out2)
    ref2 = jnp.pad(x2, ((0, 0), (C_OUT2 - C_IN2, 0), (0, 0), (0, 0)))
    assert out2.shape == (B, C_OUT2, H, W)
    assert out2.dtype == x2.dtype
    assert jnp.allclose(out2, ref2)

    # --- Branch 3: c_in == c_out -> identity ---
    out3 = align_forward(x2, C_IN2, C_IN2)
    assert jnp.array_equal(out3, x2)

    print("KERNEL_OK")
</pallas_src>

<mosaic_0001>
module attributes {stable_mosaic.version = 11 : i64} {
  func.func @_conv1x1_kernel(%arg0: i32, %arg1: i32, %arg2: memref<1x8x256xf32, #tpu.memory_space<vmem>>, %arg3: memref<4x8xf32, #tpu.memory_space<vmem>>, %arg4: memref<4x1xf32, #tpu.memory_space<vmem>>, %arg5: memref<1x4x256xf32, #tpu.memory_space<vmem>>) attributes {dimension_semantics = [#tpu.dimension_semantics<parallel>, #tpu.dimension_semantics<parallel>], iteration_bounds = array<i64: 2, 1>, scalar_prefetch = 0 : i64, scratch_operands = 0 : i64, tpu.core_type = #tpu.core_type<tc>, window_params = [{transform_indices = @transform_0, window_bounds = array<i64: 1, 8, 256>}, {pipeline_mode = #tpu.pipeline_mode<synchronous>, transform_indices = @transform_1, window_bounds = array<i64: 4, 8>}, {pipeline_mode = #tpu.pipeline_mode<synchronous>, transform_indices = @transform_2, window_bounds = array<i64: 4, 1>}, {transform_indices = @transform_3, window_bounds = array<i64: 1, 4, 256>}]} {
    %c0 = arith.constant 0 : index
    %c0_0 = arith.constant 0 : index
    %0 = vector.load %arg3[%c0, %c0_0] : memref<4x8xf32, #tpu.memory_space<vmem>>, vector<4x8xf32>
    %c0_1 = arith.constant 0 : index
    %c0_2 = arith.constant 0 : index
    %c0_3 = arith.constant 0 : index
    %1 = vector.load %arg2[%c0_1, %c0_2, %c0_3] : memref<1x8x256xf32, #tpu.memory_space<vmem>>, vector<1x8x256xf32>
    %2 = vector.shape_cast %1 : vector<1x8x256xf32> to vector<8x256xf32>
    %cst = arith.constant dense<0.000000e+00> : vector<4x256xf32>
    %3 = tpu.matmul %0, %2, %cst {dimension_numbers = #tpu.dot_dimension_numbers<[1], [0], [0], [1], [0, 0, 1, 1], [], []>} : vector<4x8xf32>, vector<8x256xf32>, vector<4x256xf32> -> vector<4x256xf32>
    %c0_4 = arith.constant 0 : index
    %c0_5 = arith.constant 0 : index
    %4 = vector.load %arg4[%c0_4, %c0_5] : memref<4x1xf32, #tpu.memory_space<vmem>>, vector<4x1xf32>
    %5 = vector.broadcast %4 : vector<4x1xf32> to vector<4x256xf32>
    %6 = arith.addf %3, %5 : vector<4x256xf32>
    %c0_6 = arith.constant 0 : index
    %c0_7 = arith.constant 0 : index
    %c0_8 = arith.constant 0 : index
    %7 = vector.load %arg5[%c0_6, %c0_7, %c0_8] : memref<1x4x256xf32, #tpu.memory_space<vmem>>, vector<1x4x256xf32>
    %8 = vector.shape_cast %7 : vector<1x4x256xf32> to vector<4x256xf32>
    %9 = vector.shape_cast %6 : vector<4x256xf32> to vector<1x4x256xf32>
    tpu.vector_store %arg5[%c0_6, %c0_7, %c0_8], %9 {strides = array<i32>} : memref<1x4x256xf32, #tpu.memory_space<vmem>>, vector<1x4x256xf32>,
    return
  }
  func.func @transform_0(%arg0: i32, %arg1: i32) -> (i32, i32, i32) {
    %c0_i32 = arith.constant 0 : i32
    %c0_i32_0 = arith.constant 0 : i32
    return %arg0, %c0_i32, %arg1 : i32, i32, i32
  }
  func.func @transform_1(%arg0: i32, %arg1: i32) -> (i32, i32) {
    %c0_i32 = arith.constant 0 : i32
    %c0_i32_0 = arith.constant 0 : i32
    %c0_i32_1 = arith.constant 0 : i32
    return %c0_i32, %c0_i32_0 : i32, i32
  }
  func.func @transform_2(%arg0: i32, %arg1: i32) -> (i32, i32) {
    %c0_i32 = arith.constant 0 : i32
    %c0_i32_0 = arith.constant 0 : i32
    %c0_i32_1 = arith.constant 0 : i32
    return %c0_i32, %c0_i32_0 : i32, i32
  }
  func.func @transform_3(%arg0: i32, %arg1: i32) -> (i32, i32, i32) {
    %c0_i32 = arith.constant 0 : i32
    %c0_i32_0 = arith.constant 0 : i32
    return %arg0, %c0_i32, %arg1 : i32, i32, i32
  }
}

</mosaic_0001>

<llo_original>
// kernel: tpu_custom_call.1
$region0: #{tpu_custom_call.1}
  #allocation0 [shape = 'u32[]', space=smem, size = 0x4, offset = 0x4, fixed_abs, tag = 'smem constant byte address 0x4 - core index']
  #allocation1 [shape = 'u32[72,128]{1,0:T(1,128)}', space=vmem, size = 0x9000, scoped, tag = 'internal scratch']
  %s0 = inlined_call_operand.hbm [shape: f32[2,8,256], index: 0, kind: input, shape index: {}]
  %s1 = inlined_call_operand.vmem [shape: f32[4,8], index: 1, kind: input, shape index: {}]
  %s2 = inlined_call_operand.vmem [shape: f32[4,1], index: 2, kind: input, shape index: {}]
  %s3 = inlined_call_operand.hbm [shape: f32[2,4,256], index: 3, kind: output, shape index: {}]
  %s4 = sld [smem:[#allocation0]]
  $region49: #{tpu_custom_call.1} parent=0
    _
  %s6 = ssub.s32 1, %s4
  %s7 = scalar_select 0, %s6, %s4
  $region1: #{tpu_custom_call.1} parent=0
    #allocation2 [shape = 'u8[16384]{0}', space=vmem, size = 0x4000, scoped, tag = 'input window, operand 0']
    #allocation3 [shape = 's32[2]{0}', space=sflag, size = 0x8, scoped, tag = 'scoped memory for tpu_custom_call.1']
    #allocation4 [shape = 's32[2]{0}', space=sflag, size = 0x8, scoped, tag = 'scoped memory for tpu_custom_call.1']
    #allocation5 [shape = 'u8[8192]{0}', space=vmem, size = 0x2000, scoped, tag = 'output window, operand 0']
    %8 = vsyncpa [#allocation3], 0
    %s9 = scalar_lea.sflag [#allocation3], 1
    %10 = vsyncpa %s9, 0
    %11 = vsyncpa [#allocation4], 0
    %s12 = scalar_lea.sflag [#allocation4], 1
    %13 = vsyncpa %s12, 0
    loop: start=0, step=1, limit=4
    $region2: #{tpu_custom_call.1} parent=1 // loop_pre_header
      _
    $region3: #{tpu_custom_call.1} parent=1 // loop_header
      %s15 = sphi 0, %s19
      %p16 = scmp.ge.s32.totalorder %s15, 4
      %s22 = sphi 0, %s34
      %s23 = sphi 0, %s30
      %s24 = sphi 0, %s22
      %s25 = sphi 0, %s23
      %s26 = sphi 0, %s24
      %s27 = sphi 0, %s25
      %s39 = sphi 0, %s41
      %s42 = sphi 0, %s39
      %s43 = sphi 0, %s42
      %s59 = sphi 0, %s43
      %s63 = sphi 0, %s63
      %s65 = sphi 0, %s63
      %s66 = sphi 0, %s65
      %s80 = sphi 0, %s66
      %s84 = sphi 0, %s84
      %s86 = sphi 0, %s84
      %s87 = sphi 0, %s86
      %s101 = sphi 0, %s87
      %s109 = sphi 0, %s111
      %s112 = sphi 0, %s109
      %s113 = sphi 0, %s112
      %s129 = sphi 0, %s113
    $region4: #{tpu_custom_call.1} parent=1 // loop_header_branch
      %18 = sbr.rel (%p16) target = $region8
    $region5: #{tpu_custom_call.1} parent=1 // loop_body
      %s20 = ssub.s32 %s15, 1
      %s21 = ssub.s32 %s15, 2
      %s28 = sadd.s32 1, %s23
      %p29 = scmp.ge.s32.totalorder %s28, 1
      %s30 = scalar_select %p29, 0, %s28
      %s31 = sadd.s32 1, %s22
      %s32 = scalar_select %p29, %s31, %s22
      %p33 = scmp.ge.s32.totalorder %s32, 2
      %s34 = scalar_select %p33, 0, %s32
      %s35 = ssub.s32 %s22, %s34
      %s36 = ssub.s32 %s23, %s30
      %s37 = sor.u32 %s35, %s36
      %p38 = scmp.eq.s32.totalorder %s37, 0
      %s40 = sadd.s32 %s39, 1
      %s41 = scalar_select %p38, %s39, %s40
      %p44 = pneg %p38
      %p45 = scmp.eq.s32.totalorder %s15, 1
      %p46 = por %p44, %p45
      %p47 = scmp.ne.s32.totalorder %s39, %s42
      %p48 = scmp.eq.s32.totalorder %s15, 0
      %p49 = por %p47, %p48
      %p50 = scmp.ne.s32.totalorder %s39, %s42
      %p51 = scmp.eq.s32.totalorder %s20, 1
      %p52 = por %p50, %p51
      %p53 = scmp.ne.s32.totalorder %s42, %s43
      %p54 = scmp.eq.s32.totalorder %s20, 0
      %p55 = por %p53, %p54
      %p56 = scmp.ne.s32.totalorder %s42, %s43
      %p57 = scmp.eq.s32.totalorder %s21, 1
      %p58 = por %p56, %p57
      %p60 = scmp.ne.s32.totalorder %s43, %s59
      %p61 = scmp.eq.s32.totalorder %s21, 0
      %p62 = por %p60, %p61
      %s64 = sadd.s32 %s63, 1
      %p67 = scmp.eq.s32.totalorder %s15, 1
      %p68 = scmp.ne.s32.totalorder %s63, %s65
      %p69 = scmp.eq.s32.totalorder %s15, 0
      %p70 = por %p68, %p69
      %p71 = scmp.ne.s32.totalorder %s63, %s65
      %p72 = scmp.eq.s32.totalorder %s20, 1
      %p73 = por %p71, %p72
      %p74 = scmp.ne.s32.totalorder %s65, %s66
      %p75 = scmp.eq.s32.totalorder %s20, 0
      %p76 = por %p74, %p75
      %p77 = scmp.ne.s32.totalorder %s65, %s66
      %p78 = scmp.eq.s32.totalorder %s21, 1
      %p79 = por %p77, %p78
      %p81 = scmp.ne.s32.totalorder %s66, %s80
      %p82 = scmp.eq.s32.totalorder %s21, 0
      %p83 = por %p81, %p82
      %s85 = sadd.s32 %s84, 1
      %p88 = scmp.eq.s32.totalorder %s15, 1
      %p89 = scmp.ne.s32.totalorder %s84, %s86
      %p90 = scmp.eq.s32.totalorder %s15, 0
      %p91 = por %p89, %p90
      %p92 = scmp.ne.s32.totalorder %s84, %s86
      %p93 = scmp.eq.s32.totalorder %s20, 1
      %p94 = por %p92, %p93
      %p95 = scmp.ne.s32.totalorder %s86, %s87
      %p96 = scmp.eq.s32.totalorder %s20, 0
      %p97 = por %p95, %p96
      %p98 = scmp.ne.s32.totalorder %s86, %s87
      %p99 = scmp.eq.s32.totalorder %s21, 1
      %p100 = por %p98, %p99
      %p102 = scmp.ne.s32.totalorder %s87, %s101
      %p103 = scmp.eq.s32.totalorder %s21, 0
      %p104 = por %p102, %p103
      %s105 = ssub.s32 %s22, %s34
      %s106 = ssub.s32 %s23, %s30
      %s107 = sor.u32 %s105, %s106
      %p108 = scmp.eq.s32.totalorder %s107, 0
      %s110 = sadd.s32 %s109, 1
      %s111 = scalar_select %p108, %s109, %s110
      %p114 = pneg %p108
      %p115 = scmp.eq.s32.totalorder %s15, 1
      %p116 = por %p114, %p115
      %p117 = scmp.ne.s32.totalorder %s109, %s112
      %p118 = scmp.eq.s32.totalorder %s15, 0
      %p119 = por %p117, %p118
      %p120 = scmp.ne.s32.totalorder %s109, %s112
      %p121 = scmp.eq.s32.totalorder %s20, 1
      %p122 = por %p120, %p121
      %p123 = scmp.ne.s32.totalorder %s112, %s113
      %p124 = scmp.eq.s32.totalorder %s20, 0
      %p125 = por %p123, %p124
      %p126 = scmp.ne.s32.totalorder %s112, %s113
      %p127 = scmp.eq.s32.totalorder %s21, 1
      %p128 = por %p126, %p127
      %p130 = scmp.ne.s32.totalorder %s113, %s129
      %p131 = scmp.eq.s32.totalorder %s21, 0
      %p132 = por %p130, %p131
      %p133 = scmp.le.s32.totalorder 1, %s15
      %p134 = scmp.lt.s32.totalorder %s15, 3
      %p135 = pnand %p133, %p134
      %p136 = pneg %p135
      // Predicated region
      $region9: #{tpu_custom_call.1} parent=5 // pred_check
        _
      $region10: #{tpu_custom_call.1} parent=5 // pred_check_branch
        %138 = sbr.rel (%p135) target = $region12
      $region11: #{tpu_custom_call.1} parent=5 // pred_region
        %s139 = ssub.s32 %s15, 1
        // Predicated region
        $region13: #{tpu_custom_call.1} parent=11 // pred_check
          %p140 = pneg %p76
        $region14: #{tpu_custom_call.1} parent=11 // pred_check_branch
          %142 = sbr.rel (%p140) target = $region16
        $region15: #{tpu_custom_call.1} parent=11 // pred_region
          _
        $region16: #{tpu_custom_call.1} parent=11 // pred_fallthru
          _
        // Predicated region
        $region17: #{tpu_custom_call.1} parent=11 // pred_check
          %p143 = pneg %p97
        $region18: #{tpu_custom_call.1} parent=11 // pred_check_branch
          %145 = sbr.rel (%p143) target = $region20
        $region19: #{tpu_custom_call.1} parent=11 // pred_region
          _
        $region20: #{tpu_custom_call.1} parent=11 // pred_fallthru
          _
      $region12: #{tpu_custom_call.1} parent=5 // pred_fallthru
        _
      %p146 = scmp.lt.s32.totalorder %s15, 2
      // Predicated region
      $region21: #{tpu_custom_call.1} parent=5 // pred_check
        %p147 = pneg %p146
      $region22: #{tpu_custom_call.1} parent=5 // pred_check_branch
        %149 = sbr.rel (%p147) target = $region24
      $region23: #{tpu_custom_call.1} parent=5 // pred_region
        // Predicated region
        $region25: #{tpu_custom_call.1} parent=23 // pred_check
          %p150 = pneg %p49
        $region26: #{tpu_custom_call.1} parent=23 // pred_check_branch
          %152 = sbr.rel (%p150) target = $region28
        $region27: #{tpu_custom_call.1} parent=23 // pred_region
          %s153 = sand.u32 %s39, 1
          %s154 = scalar_lea.sflag [#allocation3], %s153
          %s155 = sand.u32 %s39, 1
          %s156 = smul.addr %s155, 16
          %s157 = scalar_lea.vmem [#allocation2], %s156
          %s158 = smul.u32 2, %s23
          %160 = vsyncadd %s154, 0
          %s161 = smul.addr %s22, 2
          %s162 = sadd.s32 %s158, %s161
          %s163 = smul.addr %s162, 8
          %s164 = scalar_lea.hbm %s0, %s163
          %s166 = sshll.u32 %s164, 4
          %s167 = int_to_ptr.hbm [resolvable:$true] %s166
          %s168 = sshll.u32 %s157, 4
          %s169 = int_to_ptr.vmem [resolvable:$true] %s168
          %171 = dma.hbm_to_vmem [thread:$0]  %s167, 256, %s169, %s154
        $region28: #{tpu_custom_call.1} parent=23 // pred_fallthru
          _
      $region24: #{tpu_custom_call.1} parent=5 // pred_fallthru
        _
      %p172 = scmp.le.s32.totalorder 1, %s15
      %p173 = scmp.lt.s32.totalorder %s15, 3
      %p174 = pnand %p172, %p173
      %p175 = pneg %p174
      // Predicated region
      $region29: #{tpu_custom_call.1} parent=5 // pred_check
        _
      $region30: #{tpu_custom_call.1} parent=5 // pred_check_branch
        %177 = sbr.rel (%p174) target = $region32
      $region31: #{tpu_custom_call.1} parent=5 // pred_region
        %s178 = ssub.s32 %s15, 1
        %s179 = sand.u32 %s42, 1
        %s180 = scalar_lea.sflag [#allocation3], %s179
        %s181 = sand.u32 %s42, 1
        %s182 = smul.addr %s181, 16
        %s183 = scalar_lea.vmem [#allocation2], %s182
        // Predicated region
        $region33: #{tpu_custom_call.1} parent=31 // pred_check
          %p184 = pneg %p55
        $region34: #{tpu_custom_call.1} parent=31 // pred_check_branch
          %186 = sbr.rel (%p184) target = $region36
        $region35: #{tpu_custom_call.1} parent=31 // pred_region
          %188 = dma.done %s180, 256
        $region36: #{tpu_custom_call.1} parent=31 // pred_fallthru
          _
        %s189 = sand.u32 %s42, 1
        %s190 = scalar_lea.sflag [#allocation3], %s189
        %s191 = sand.u32 %s42, 1
        %s192 = smul.addr %s191, 16
        %s193 = scalar_lea.vmem [#allocation2], %s192
        %p194 = pneg %p55
        %p195 = pneg %p52
        %p196 = pneg %p76
        %p197 = pneg %p73
        %p198 = pneg %p97
        %p199 = pneg %p94
        %p200 = pneg %p125
        %p201 = pneg %p122
        %s202 = sand.u32 %s112, 1
        %s203 = scalar_lea.sflag [#allocation4], %s202
        %s204 = sand.u32 %s112, 1
        %s205 = smul.addr %s204, 8
        %s206 = scalar_lea.vmem [#allocation5], %s205
        %s207 = smul.u32 2, %s25
        %s208 = smul.u32 2, %s25
        %v209 = vld [vmem:[%s1] sm:$0xf]
        %v210 = vld [vmem:[%s183] sm:$0xff]
        %v211 = vld [vmem:[%s183 + $0x8] sm:$0xff]
        %v212 = vld [vmem:[%s2] sm:$0xf]
        %214 = vset.pattern.permute.xlu0 0
        %215 = vperm.xlu0 %214, %v212
        %v216 = vpop.permute.xlu0 %215
        %vm218 = vcmask 64512
        %v220 = vsel %vm218, %v209, 0
        %222 = vmatpush.msra.mxu0 0.0
        %223 = vmatpush.msra.mxu0 0.0
        %224 = vmatpush.msra.mxu0 0.0
        %225 = vmatpush.msra.mxu0 0.0
        %226 = vmatpush.msra.mxu0 0.0
        %227 = vmatpush.msra.mxu0 0.0
        %228 = vmatpush.msra.mxu0 0.0
        %229 = vmatpush.msra.mxu0 0.0
        %230 = vmatpush.msra.mxu0 0.0
        %231 = vmatpush.msra.mxu0 0.0
        %232 = vmatpush.msra.mxu0 0.0
        %233 = vmatpush.msra.mxu0 0.0
        %234 = vmatpush.msra.mxu0 0.0
        %235 = vmatpush.msra.mxu0 0.0
        %236 = vmatpush.msra.mxu0 0.0
        %237 = vmatpush.msra.mxu0 %v210
        %238 = vmatmul.f32.gmra.mxu0 %v220
        %v239 = vpop.f32.mrf.mxu0
        %v240 = vadd.f32 %v216, %v239
        %241 = vdwg.mxu0
        %242 = vmatpush.msra.mxu0 0.0
        %243 = vmatpush.msra.mxu0 0.0
        %244 = vmatpush.msra.mxu0 0.0
        %245 = vmatpush.msra.mxu0 0.0
        %246 = vmatpush.msra.mxu0 0.0
        %247 = vmatpush.msra.mxu0 0.0
        %248 = vmatpush.msra.mxu0 0.0
        %249 = vmatpush.msra.mxu0 0.0
        %250 = vmatpush.msra.mxu0 0.0
        %251 = vmatpush.msra.mxu0 0.0
        %252 = vmatpush.msra.mxu0 0.0
        %253 = vmatpush.msra.mxu0 0.0
        %254 = vmatpush.msra.mxu0 0.0
        %255 = vmatpush.msra.mxu0 0.0
        %256 = vmatpush.msra.mxu0 0.0
        %257 = vmatpush.msra.mxu0 %v211
        %258 = vmatmul.f32.gmra.mxu0 %v220
        %v259 = vpop.f32.mrf.mxu0
        %v260 = vadd.f32 %v216, %v259
        %261 = vdwg.mxu0
        %v264 = vrot.slane %v260, 4
        %vm265 = vcmask 1043456
        %v266 = vsel %vm265, %v240, %v264
        %268 = vst [vmem:[%s206] sm:$0xff] %v266
        %s269 = sand.u32 %s112, 1
        %s270 = scalar_lea.sflag [#allocation4], %s269
        %s271 = sand.u32 %s112, 1
        %s272 = smul.addr %s271, 8
        %s273 = scalar_lea.vmem [#allocation5], %s272
        // Predicated region
        $region37: #{tpu_custom_call.1} parent=31 // pred_check
          %p274 = pneg %p122
        $region38: #{tpu_custom_call.1} parent=31 // pred_check_branch
          %276 = sbr.rel (%p274) target = $region40
        $region39: #{tpu_custom_call.1} parent=31 // pred_region
          %s277 = smul.u32 2, %s25
          %279 = vsyncadd %s270, 0
          %s280 = smul.addr %s24, 2
          %s281 = sadd.s32 %s277, %s280
          %s282 = smul.addr %s281, 4
          %s283 = scalar_lea.hbm %s3, %s282
          %s285 = sshll.u32 %s273, 4
          %s286 = int_to_ptr.vmem [resolvable:$true] %s285
          %s287 = sshll.u32 %s283, 4
          %s288 = int_to_ptr.hbm [resolvable:$true] %s287
          %290 = dma.vmem_to_hbm [thread:$0]  %s286, 128, %s288, %s270
        $region40: #{tpu_custom_call.1} parent=31 // pred_fallthru
          _
      $region32: #{tpu_custom_call.1} parent=5 // pred_fallthru
        _
      %p291 = scmp.le.s32.totalorder 2, %s15
      // Predicated region
      $region41: #{tpu_custom_call.1} parent=5 // pred_check
        %p292 = pneg %p291
      $region42: #{tpu_custom_call.1} parent=5 // pred_check_branch
        %294 = sbr.rel (%p292) target = $region44
      $region43: #{tpu_custom_call.1} parent=5 // pred_region
        %s295 = ssub.s32 %s15, 2
        // Predicated region
        $region45: #{tpu_custom_call.1} parent=43 // pred_check
          %p296 = pneg %p128
        $region46: #{tpu_custom_call.1} parent=43 // pred_check_branch
          %298 = sbr.rel (%p296) target = $region48
        $region47: #{tpu_custom_call.1} parent=43 // pred_region
          %s299 = sand.u32 %s113, 1
          %s300 = scalar_lea.sflag [#allocation4], %s299
          %s301 = sand.u32 %s113, 1
          %s302 = smul.addr %s301, 8
          %s303 = scalar_lea.vmem [#allocation5], %s302
          %305 = dma.done %s300, 128
        $region48: #{tpu_custom_call.1} parent=43 // pred_fallthru
          _
      $region44: #{tpu_custom_call.1} parent=5 // pred_fallthru
        _
    $region6: #{tpu_custom_call.1} parent=1 // loop_footer
      %s19 = sadd.s32 1, %s15
    $region7: #{tpu_custom_call.1} parent=1 // loop_footer_branch
      %14 = sbr.rel target = $region3
    $region8: #{tpu_custom_call.1} parent=1 // loop_exit
      _
    %306 = vsyncpa [#allocation3], 1
    %s307 = scalar_lea.sflag [#allocation3], 1
    %308 = vsyncpa %s307, 1
    %309 = vsyncpa [#allocation4], 1
    %s310 = scalar_lea.sflag [#allocation4], 1
    %311 = vsyncpa %s310, 1

</llo_original>
